<compile_context>
chip_gen: v7x
topology: tpu7x:2x2x1
jax: 0.10.0
libtpu: 0.0.40
codegen_flags: <defaults>
</compile_context>

<pallas_src>
import functools

import jax
import jax.numpy as jnp
from jax.experimental import pallas as pl
from jax.experimental.pallas import tpu as pltpu

LN_EPS = 1e-5  # torch.nn.LayerNorm default


def _round_up(n, m):
    return ((n + m - 1) // m) * m


def classifier_mlp_kernel(x_ref, w1_ref, b1_ref, w2_ref, b2_ref, o_ref, *,
                          d_hid, ln_eps):
    """One (TB, d_inp) batch tile -> (TB, n_classes) logits tile.

    x_ref : (TB, d_inp)        f32   (unpadded; cast to bf16 here)
    w1_ref: (d_inp, d_hid_p)   bf16  (padded hidden cols are zero)
    b1_ref: (1, d_hid_p)       f32   (padded cols are zero)
    w2_ref: (d_hid_p, n_cls)   bf16  (= diag(gamma) @ w2; padded rows are zero)
    b2_ref: (1, n_cls)         f32   (= beta @ w2 + b2)
    o_ref : (TB, n_cls)        f32
    """
    # ---- Linear 1 (MXU, bf16 inputs -> f32 accumulate) ----
    x = x_ref[...].astype(jnp.bfloat16)
    h = jnp.dot(x, w1_ref[...], preferred_element_type=jnp.float32) + b1_ref[...]
    # ---- Tanh (EUP) ----  padded hidden cols stay exactly 0 (tanh(0) == 0)
    h = jnp.tanh(h)

    # ---- LayerNorm over the real d_hid columns (single-pass stats) ----
    inv_d = 1.0 / float(d_hid)
    s1 = jnp.sum(h, axis=-1, keepdims=True)        # padded lanes contribute 0
    s2 = jnp.sum(h * h, axis=-1, keepdims=True)
    mu = s1 * inv_d
    var = jnp.maximum(s2 * inv_d - mu * mu, 0.0)
    hn = (h - mu) * jax.lax.rsqrt(var + ln_eps)
    # Padded lanes of hn (= -mu * rsqrt) hit the zero rows of w2' -> no mask
    # needed; gamma/beta are already folded into w2'/b2'.

    # ---- Dropout: identity in eval mode ----
    # ---- Linear 2 (MXU, bf16 inputs -> f32 accumulate) ----
    logits = jnp.dot(hn.astype(w2_ref.dtype), w2_ref[...],
                     preferred_element_type=jnp.float32) + b2_ref[...]
    o_ref[...] = logits.astype(o_ref.dtype)


@functools.partial(jax.jit, static_argnames=("tb",))
def classifier_forward(x, w1, b1, gamma, beta, w2, b2, *, tb=512):
    """seq_emb (B, d_inp) -> logits (B, n_classes). Weights are (in, out)."""
    B, d_inp = x.shape
    d_hid = w1.shape[1]
    n_classes = w2.shape[1]

    # Fold LayerNorm affine into the second linear (in f32, full precision).
    gamma2 = gamma.reshape(-1).astype(jnp.float32)
    beta2 = beta.reshape(1, -1).astype(jnp.float32)
    w2f = w2.astype(jnp.float32)
    w2_fold = gamma2[:, None] * w2f                       # (d_hid, n_classes)
    b2_fold = beta2 @ w2f + b2.reshape(1, -1).astype(jnp.float32)

    # Only the small weight/bias tensors get hidden-dim padding (128 lanes).
    d_hid_p = _round_up(d_hid, 128)
    w1_p = jnp.zeros((d_inp, d_hid_p), jnp.bfloat16)
    w1_p = w1_p.at[:, :d_hid].set(w1.astype(jnp.bfloat16))
    b1_p = jnp.zeros((1, d_hid_p), jnp.float32)
    b1_p = b1_p.at[:, :d_hid].set(b1.reshape(1, -1).astype(jnp.float32))
    w2_p = jnp.zeros((d_hid_p, n_classes), jnp.bfloat16)
    w2_p = w2_p.at[:d_hid, :].set(w2_fold.astype(jnp.bfloat16))
    b2_p = b2_fold                                        # (1, n_classes) f32

    # Batch tile: >=2 balanced grid steps (v7x megacore), 8-row (f32) multiple,
    # capped at `tb` to amortize per-step overhead on v5e/v6e.
    if B <= 8:
        TB = B                                  # single full-extent block
    else:
        TB = min(tb, _round_up(pl.cdiv(B, 2), 8))
    grid = (pl.cdiv(B, TB),)

    kernel = functools.partial(classifier_mlp_kernel, d_hid=d_hid, ln_eps=LN_EPS)

    cost = pl.CostEstimate(
        flops=2 * B * d_inp * d_hid_p + 2 * B * d_hid_p * n_classes,
        transcendentals=B * d_hid_p + B,                  # tanh + rsqrt
        bytes_accessed=(B * d_inp * 4                     # x (f32, unpadded)
                        + d_inp * d_hid_p * 2             # w1 (bf16)
                        + d_hid_p * 4                     # b1
                        + d_hid_p * n_classes * 2         # w2' (bf16)
                        + n_classes * 4                   # b2'
                        + B * n_classes * 4),             # logits (unpadded)
    )

    out = pl.pallas_call(
        kernel,
        out_shape=jax.ShapeDtypeStruct((B, n_classes), jnp.float32),
        grid=grid,
        in_specs=[
            pl.BlockSpec((TB, d_inp), lambda i: (i, 0)),        # x: tiled batch
            pl.BlockSpec((d_inp, d_hid_p), lambda i: (0, 0)),   # w1: resident
            pl.BlockSpec((1, d_hid_p), lambda i: (0, 0)),       # b1: resident
            pl.BlockSpec((d_hid_p, n_classes), lambda i: (0, 0)),  # w2': resident
            pl.BlockSpec((1, n_classes), lambda i: (0, 0)),     # b2': resident
        ],
        out_specs=pl.BlockSpec((TB, n_classes), lambda i: (i, 0)),
        compiler_params=pltpu.CompilerParams(
            dimension_semantics=("parallel",),   # batch tiles across TCs (v7x)
        ),
        cost_estimate=cost,
    )(x, w1_p, b1_p, w2_p, b2_p)

    return out


def init_params(key, d_inp, d_hid, n_classes, dtype=jnp.float32):
    """Deterministic init mimicking nn.Linear's U(-1/sqrt(fan_in), 1/sqrt(fan_in))."""
    k1, k2, k3, k4 = jax.random.split(key, 4)
    lim1 = 1.0 / jnp.sqrt(d_inp)
    lim2 = 1.0 / jnp.sqrt(d_hid)
    w1 = jax.random.uniform(k1, (d_inp, d_hid), dtype, -lim1, lim1)
    b1 = jax.random.uniform(k2, (d_hid,), dtype, -lim1, lim1)
    gamma = jnp.ones((d_hid,), dtype)   # LayerNorm weight
    beta = jnp.zeros((d_hid,), dtype)   # LayerNorm bias
    w2 = jax.random.uniform(k3, (d_hid, n_classes), dtype, -lim2, lim2)
    b2 = jax.random.uniform(k4, (n_classes,), dtype, -lim2, lim2)
    return w1, b1, gamma, beta, w2, b2


if __name__ == "__main__":
    B, d_inp, d_hid, n_classes = 16, 32, 64, 8

    key = jax.random.PRNGKey(0)
    kx, kp = jax.random.split(key)
    x = jax.random.normal(kx, (B, d_inp), jnp.float32)
    w1, b1, gamma, beta, w2, b2 = init_params(kp, d_inp, d_hid, n_classes)

    logits = classifier_forward(x, w1, b1, gamma, beta, w2, b2)
    jax.block_until_ready(logits)

    # Pure-JAX f32 reference (same math as the PyTorch module in eval mode).
    h = jnp.tanh(x @ w1 + b1)
    mu = h.mean(-1, keepdims=True)
    var = ((h - mu) ** 2).mean(-1, keepdims=True)
    h = (h - mu) / jnp.sqrt(var + LN_EPS) * gamma + beta
    ref = h @ w2 + b2

    assert logits.shape == (B, n_classes)
    # bf16 MXU inputs (f32 accumulate) => small rounding vs the f32 reference.
    assert jnp.allclose(logits, ref, atol=5e-2, rtol=5e-2), (
        float(jnp.max(jnp.abs(logits - ref))))

    print("KERNEL_OK")
</pallas_src>

<mosaic_0001>
module attributes {stable_mosaic.version = 11 : i64} {
  func.func @classifier_mlp_kernel(%arg0: i32, %arg1: memref<8x32xf32, #tpu.memory_space<vmem>>, %arg2: memref<32x128xbf16, #tpu.memory_space<vmem>>, %arg3: memref<1x128xf32, #tpu.memory_space<vmem>>, %arg4: memref<128x8xbf16, #tpu.memory_space<vmem>>, %arg5: memref<1x8xf32, #tpu.memory_space<vmem>>, %arg6: memref<8x8xf32, #tpu.memory_space<vmem>>) attributes {dimension_semantics = [#tpu.dimension_semantics<parallel>], iteration_bounds = array<i64: 2>, scalar_prefetch = 0 : i64, scratch_operands = 0 : i64, tpu.core_type = #tpu.core_type<tc>, window_params = [{transform_indices = @transform_0, window_bounds = array<i64: 8, 32>}, {pipeline_mode = #tpu.pipeline_mode<synchronous>, transform_indices = @transform_1, window_bounds = array<i64: 32, 128>}, {pipeline_mode = #tpu.pipeline_mode<synchronous>, transform_indices = @transform_2, window_bounds = array<i64: 1, 128>}, {pipeline_mode = #tpu.pipeline_mode<synchronous>, transform_indices = @transform_3, window_bounds = array<i64: 128, 8>}, {pipeline_mode = #tpu.pipeline_mode<synchronous>, transform_indices = @transform_4, window_bounds = array<i64: 1, 8>}, {transform_indices = @transform_5, window_bounds = array<i64: 8, 8>}]} {
    %c0 = arith.constant 0 : index
    %c0_0 = arith.constant 0 : index
    %0 = vector.load %arg1[%c0, %c0_0] : memref<8x32xf32, #tpu.memory_space<vmem>>, vector<8x32xf32>
    %1 = arith.truncf %0 : vector<8x32xf32> to vector<8x32xbf16>
    %c0_1 = arith.constant 0 : index
    %c0_2 = arith.constant 0 : index
    %2 = vector.load %arg2[%c0_1, %c0_2] : memref<32x128xbf16, #tpu.memory_space<vmem>>, vector<32x128xbf16>
    %cst = arith.constant dense<0.000000e+00> : vector<8x128xf32>
    %3 = tpu.matmul %1, %2, %cst {dimension_numbers = #tpu.dot_dimension_numbers<[1], [0], [0], [1], [0, 0, 1, 1], [], []>} : vector<8x32xbf16>, vector<32x128xbf16>, vector<8x128xf32> -> vector<8x128xf32>
    %c0_3 = arith.constant 0 : index
    %c0_4 = arith.constant 0 : index
    %4 = vector.load %arg3[%c0_3, %c0_4] : memref<1x128xf32, #tpu.memory_space<vmem>>, vector<1x128xf32>
    %5 = vector.broadcast %4 : vector<1x128xf32> to vector<8x128xf32>
    %6 = arith.addf %3, %5 : vector<8x128xf32>
    %7 = math.tanh %6 : vector<8x128xf32>
    %cst_5 = arith.constant dense<0.000000e+00> : vector<8xf32>
    %8 = vector.multi_reduction <add>, %7, %cst_5 [1] : vector<8x128xf32> to vector<8xf32>
    %9 = vector.shape_cast %8 : vector<8xf32> to vector<8x1xf32>
    %10 = arith.mulf %7, %7 : vector<8x128xf32>
    %cst_6 = arith.constant dense<0.000000e+00> : vector<8xf32>
    %11 = vector.multi_reduction <add>, %10, %cst_6 [1] : vector<8x128xf32> to vector<8xf32>
    %12 = vector.shape_cast %11 : vector<8xf32> to vector<8x1xf32>
    %cst_7 = arith.constant 1.562500e-02 : f32
    %13 = vector.broadcast %cst_7 : f32 to vector<8x1xf32>
    %14 = arith.mulf %9, %13 : vector<8x1xf32>
    %cst_8 = arith.constant 1.562500e-02 : f32
    %15 = vector.broadcast %cst_8 : f32 to vector<8x1xf32>
    %16 = arith.mulf %12, %15 : vector<8x1xf32>
    %17 = arith.mulf %14, %14 : vector<8x1xf32>
    %18 = arith.subf %16, %17 : vector<8x1xf32>
    %cst_9 = arith.constant 0.000000e+00 : f32
    %19 = vector.broadcast %cst_9 : f32 to vector<8x1xf32>
    %20 = arith.maximumf %18, %19 : vector<8x1xf32>
    %21 = vector.broadcast %14 : vector<8x1xf32> to vector<8x128xf32>
    %22 = arith.subf %7, %21 : vector<8x128xf32>
    %cst_10 = arith.constant 9.99999974E-6 : f32
    %23 = vector.broadcast %cst_10 : f32 to vector<8x1xf32>
    %24 = arith.addf %20, %23 : vector<8x1xf32>
    %25 = math.rsqrt %24 : vector<8x1xf32>
    %26 = vector.broadcast %25 : vector<8x1xf32> to vector<8x128xf32>
    %27 = arith.mulf %22, %26 : vector<8x128xf32>
    %28 = arith.truncf %27 : vector<8x128xf32> to vector<8x128xbf16>
    %c0_11 = arith.constant 0 : index
    %c0_12 = arith.constant 0 : index
    %29 = vector.load %arg4[%c0_11, %c0_12] : memref<128x8xbf16, #tpu.memory_space<vmem>>, vector<128x8xbf16>
    %cst_13 = arith.constant dense<0.000000e+00> : vector<8x8xf32>
    %30 = tpu.matmul %28, %29, %cst_13 {dimension_numbers = #tpu.dot_dimension_numbers<[1], [0], [0], [1], [0, 0, 1, 1], [], []>} : vector<8x128xbf16>, vector<128x8xbf16>, vector<8x8xf32> -> vector<8x8xf32>
    %c0_14 = arith.constant 0 : index
    %c0_15 = arith.constant 0 : index
    %31 = vector.load %arg5[%c0_14, %c0_15] : memref<1x8xf32, #tpu.memory_space<vmem>>, vector<1x8xf32>
    %32 = vector.broadcast %31 : vector<1x8xf32> to vector<8x8xf32>
    %33 = arith.addf %30, %32 : vector<8x8xf32>
    %c0_16 = arith.constant 0 : index
    %c0_17 = arith.constant 0 : index
    %34 = vector.load %arg6[%c0_16, %c0_17] : memref<8x8xf32, #tpu.memory_space<vmem>>, vector<8x8xf32>
    tpu.vector_store %arg6[%c0_16, %c0_17], %33 {strides = array<i32>} : memref<8x8xf32, #tpu.memory_space<vmem>>, vector<8x8xf32>,
    return
  }
  func.func @transform_0(%arg0: i32) -> (i32, i32) {
    %c0_i32 = arith.constant 0 : i32
    %c0_i32_0 = arith.constant 0 : i32
    return %arg0, %c0_i32 : i32, i32
  }
  func.func @transform_1(%arg0: i32) -> (i32, i32) {
    %c0_i32 = arith.constant 0 : i32
    %c0_i32_0 = arith.constant 0 : i32
    %c0_i32_1 = arith.constant 0 : i32
    return %c0_i32, %c0_i32_0 : i32, i32
  }
  func.func @transform_2(%arg0: i32) -> (i32, i32) {
    %c0_i32 = arith.constant 0 : i32
    %c0_i32_0 = arith.constant 0 : i32
    %c0_i32_1 = arith.constant 0 : i32
    return %c0_i32, %c0_i32_0 : i32, i32
  }
  func.func @transform_3(%arg0: i32) -> (i32, i32) {
    %c0_i32 = arith.constant 0 : i32
    %c0_i32_0 = arith.constant 0 : i32
    %c0_i32_1 = arith.constant 0 : i32
    return %c0_i32, %c0_i32_0 : i32, i32
  }
  func.func @transform_4(%arg0: i32) -> (i32, i32) {
    %c0_i32 = arith.constant 0 : i32
    %c0_i32_0 = arith.constant 0 : i32
    %c0_i32_1 = arith.constant 0 : i32
    return %c0_i32, %c0_i32_0 : i32, i32
  }
  func.func @transform_5(%arg0: i32) -> (i32, i32) {
    %c0_i32 = arith.constant 0 : i32
    %c0_i32_0 = arith.constant 0 : i32
    return %arg0, %c0_i32 : i32, i32
  }
}

</mosaic_0001>

<llo_original>
// kernel: classifier_forward.1
$region0: #{classifier_forward.1}
  #allocation0 [shape = 'u32[]', space=smem, size = 0x4, offset = 0x4, fixed_abs, tag = 'smem constant byte address 0x4 - core index']
  #allocation1 [shape = 'u32[144,128]{1,0:T(1,128)}', space=vmem, size = 0x12000, scoped, tag = 'internal scratch']
  %s0 = inlined_call_operand.vmem [shape: f32[16,32], index: 0, kind: input, shape index: {}]
  %s1 = inlined_call_operand.vmem [shape: bf16[32,128], index: 1, kind: input, shape index: {}]
  %s2 = inlined_call_operand.vmem [shape: f32[1,128], index: 2, kind: input, shape index: {}]
  %s3 = inlined_call_operand.vmem [shape: bf16[128,8], index: 3, kind: input, shape index: {}]
  %s4 = inlined_call_operand.vmem [shape: f32[1,8], index: 4, kind: input, shape index: {}]
  %s5 = inlined_call_operand.vmem [shape: f32[16,8], index: 5, kind: output, shape index: {}]
  %s6 = sld [smem:[#allocation0]]
  $region53: #{classifier_forward.1} parent=0
    _
  %s8 = ssub.s32 1, %s6
  %s9 = scalar_select 0, %s8, %s6
  loop: start=0, step=1, limit=4
  $region2: #{classifier_forward.1} parent=0 // loop_pre_header
    _
  $region3: #{classifier_forward.1} parent=0 // loop_header
    %s11 = sphi 0, %s15
    %p12 = scmp.ge.s32.totalorder %s11, 4
    %s21 = sphi 0, %s23
    %s24 = sphi 0, %s21
    %s25 = sphi 0, %s24
    %s41 = sphi 0, %s25
    %s45 = sphi 0, %s45
    %s47 = sphi 0, %s45
    %s48 = sphi 0, %s47
    %s62 = sphi 0, %s48
    %s66 = sphi 0, %s66
    %s68 = sphi 0, %s66
    %s69 = sphi 0, %s68
    %s83 = sphi 0, %s69
    %s87 = sphi 0, %s87
    %s89 = sphi 0, %s87
    %s90 = sphi 0, %s89
    %s104 = sphi 0, %s90
    %s108 = sphi 0, %s108
    %s110 = sphi 0, %s108
    %s111 = sphi 0, %s110
    %s125 = sphi 0, %s111
    %s131 = sphi 0, %s133
    %s134 = sphi 0, %s131
    %s135 = sphi 0, %s134
    %s151 = sphi 0, %s135
  $region4: #{classifier_forward.1} parent=0 // loop_header_branch
    %14 = sbr.rel (%p12) target = $region8
  $region5: #{classifier_forward.1} parent=0 // loop_body
    %s16 = ssub.s32 %s11, 1
    %s17 = ssub.s32 %s11, 2
    %s18 = sadd.s32 %s11, 1
    %s19 = ssub.s32 %s11, %s18
    %p20 = scmp.eq.s32.totalorder %s19, 0
    %s22 = sadd.s32 %s21, 1
    %s23 = scalar_select %p20, %s21, %s22
    %p26 = pneg %p20
    %p27 = scmp.eq.s32.totalorder %s11, 1
    %p28 = por %p26, %p27
    %p29 = scmp.ne.s32.totalorder %s21, %s24
    %p30 = scmp.eq.s32.totalorder %s11, 0
    %p31 = por %p29, %p30
    %p32 = scmp.ne.s32.totalorder %s21, %s24
    %p33 = scmp.eq.s32.totalorder %s16, 1
    %p34 = por %p32, %p33
    %p35 = scmp.ne.s32.totalorder %s24, %s25
    %p36 = scmp.eq.s32.totalorder %s16, 0
    %p37 = por %p35, %p36
    %p38 = scmp.ne.s32.totalorder %s24, %s25
    %p39 = scmp.eq.s32.totalorder %s17, 1
    %p40 = por %p38, %p39
    %p42 = scmp.ne.s32.totalorder %s25, %s41
    %p43 = scmp.eq.s32.totalorder %s17, 0
    %p44 = por %p42, %p43
    %s46 = sadd.s32 %s45, 1
    %p49 = scmp.eq.s32.totalorder %s11, 1
    %p50 = scmp.ne.s32.totalorder %s45, %s47
    %p51 = scmp.eq.s32.totalorder %s11, 0
    %p52 = por %p50, %p51
    %p53 = scmp.ne.s32.totalorder %s45, %s47
    %p54 = scmp.eq.s32.totalorder %s16, 1
    %p55 = por %p53, %p54
    %p56 = scmp.ne.s32.totalorder %s47, %s48
    %p57 = scmp.eq.s32.totalorder %s16, 0
    %p58 = por %p56, %p57
    %p59 = scmp.ne.s32.totalorder %s47, %s48
    %p60 = scmp.eq.s32.totalorder %s17, 1
    %p61 = por %p59, %p60
    %p63 = scmp.ne.s32.totalorder %s48, %s62
    %p64 = scmp.eq.s32.totalorder %s17, 0
    %p65 = por %p63, %p64
    %s67 = sadd.s32 %s66, 1
    %p70 = scmp.eq.s32.totalorder %s11, 1
    %p71 = scmp.ne.s32.totalorder %s66, %s68
    %p72 = scmp.eq.s32.totalorder %s11, 0
    %p73 = por %p71, %p72
    %p74 = scmp.ne.s32.totalorder %s66, %s68
    %p75 = scmp.eq.s32.totalorder %s16, 1
    %p76 = por %p74, %p75
    %p77 = scmp.ne.s32.totalorder %s68, %s69
    %p78 = scmp.eq.s32.totalorder %s16, 0
    %p79 = por %p77, %p78
    %p80 = scmp.ne.s32.totalorder %s68, %s69
    %p81 = scmp.eq.s32.totalorder %s17, 1
    %p82 = por %p80, %p81
    %p84 = scmp.ne.s32.totalorder %s69, %s83
    %p85 = scmp.eq.s32.totalorder %s17, 0
    %p86 = por %p84, %p85
    %s88 = sadd.s32 %s87, 1
    %p91 = scmp.eq.s32.totalorder %s11, 1
    %p92 = scmp.ne.s32.totalorder %s87, %s89
    %p93 = scmp.eq.s32.totalorder %s11, 0
    %p94 = por %p92, %p93
    %p95 = scmp.ne.s32.totalorder %s87, %s89
    %p96 = scmp.eq.s32.totalorder %s16, 1
    %p97 = por %p95, %p96
    %p98 = scmp.ne.s32.totalorder %s89, %s90
    %p99 = scmp.eq.s32.totalorder %s16, 0
    %p100 = por %p98, %p99
    %p101 = scmp.ne.s32.totalorder %s89, %s90
    %p102 = scmp.eq.s32.totalorder %s17, 1
    %p103 = por %p101, %p102
    %p105 = scmp.ne.s32.totalorder %s90, %s104
    %p106 = scmp.eq.s32.totalorder %s17, 0
    %p107 = por %p105, %p106
    %s109 = sadd.s32 %s108, 1
    %p112 = scmp.eq.s32.totalorder %s11, 1
    %p113 = scmp.ne.s32.totalorder %s108, %s110
    %p114 = scmp.eq.s32.totalorder %s11, 0
    %p115 = por %p113, %p114
    %p116 = scmp.ne.s32.totalorder %s108, %s110
    %p117 = scmp.eq.s32.totalorder %s16, 1
    %p118 = por %p116, %p117
    %p119 = scmp.ne.s32.totalorder %s110, %s111
    %p120 = scmp.eq.s32.totalorder %s16, 0
    %p121 = por %p119, %p120
    %p122 = scmp.ne.s32.totalorder %s110, %s111
    %p123 = scmp.eq.s32.totalorder %s17, 1
    %p124 = por %p122, %p123
    %p126 = scmp.ne.s32.totalorder %s111, %s125
    %p127 = scmp.eq.s32.totalorder %s17, 0
    %p128 = por %p126, %p127
    %s129 = ssub.s32 %s11, %s18
    %p130 = scmp.eq.s32.totalorder %s129, 0
    %s132 = sadd.s32 %s131, 1
    %s133 = scalar_select %p130, %s131, %s132
    %p136 = pneg %p130
    %p137 = scmp.eq.s32.totalorder %s11, 1
    %p138 = por %p136, %p137
    %p139 = scmp.ne.s32.totalorder %s131, %s134
    %p140 = scmp.eq.s32.totalorder %s11, 0
    %p141 = por %p139, %p140
    %p142 = scmp.ne.s32.totalorder %s131, %s134
    %p143 = scmp.eq.s32.totalorder %s16, 1
    %p144 = por %p142, %p143
    %p145 = scmp.ne.s32.totalorder %s134, %s135
    %p146 = scmp.eq.s32.totalorder %s16, 0
    %p147 = por %p145, %p146
    %p148 = scmp.ne.s32.totalorder %s134, %s135
    %p149 = scmp.eq.s32.totalorder %s17, 1
    %p150 = por %p148, %p149
    %p152 = scmp.ne.s32.totalorder %s135, %s151
    %p153 = scmp.eq.s32.totalorder %s17, 0
    %p154 = por %p152, %p153
    %p155 = scmp.le.s32.totalorder 1, %s11
    %p156 = scmp.lt.s32.totalorder %s11, 3
    %p157 = pnand %p155, %p156
    %p158 = pneg %p157
    // Predicated region
    $region9: #{classifier_forward.1} parent=5 // pred_check
      _
    $region10: #{classifier_forward.1} parent=5 // pred_check_branch
      %160 = sbr.rel (%p157) target = $region12
    $region11: #{classifier_forward.1} parent=5 // pred_region
      %s161 = ssub.s32 %s11, 1
      // Predicated region
      $region13: #{classifier_forward.1} parent=11 // pred_check
        %p162 = pneg %p58
      $region14: #{classifier_forward.1} parent=11 // pred_check_branch
        %164 = sbr.rel (%p162) target = $region16
      $region15: #{classifier_forward.1} parent=11 // pred_region
        _
      $region16: #{classifier_forward.1} parent=11 // pred_fallthru
        _
      // Predicated region
      $region17: #{classifier_forward.1} parent=11 // pred_check
        %p165 = pneg %p79
      $region18: #{classifier_forward.1} parent=11 // pred_check_branch
        %167 = sbr.rel (%p165) target = $region20
      $region19: #{classifier_forward.1} parent=11 // pred_region
        _
      $region20: #{classifier_forward.1} parent=11 // pred_fallthru
        _
      // Predicated region
      $region21: #{classifier_forward.1} parent=11 // pred_check
        %p168 = pneg %p100
      $region22: #{classifier_forward.1} parent=11 // pred_check_branch
        %170 = sbr.rel (%p168) target = $region24
      $region23: #{classifier_forward.1} parent=11 // pred_region
        _
      $region24: #{classifier_forward.1} parent=11 // pred_fallthru
        _
      // Predicated region
      $region25: #{classifier_forward.1} parent=11 // pred_check
        %p171 = pneg %p121
      $region26: #{classifier_forward.1} parent=11 // pred_check_branch
        %173 = sbr.rel (%p171) target = $region28
      $region27: #{classifier_forward.1} parent=11 // pred_region
        _
      $region28: #{classifier_forward.1} parent=11 // pred_fallthru
        _
    $region12: #{classifier_forward.1} parent=5 // pred_fallthru
      _
    %p174 = scmp.lt.s32.totalorder %s11, 2
    // Predicated region
    $region29: #{classifier_forward.1} parent=5 // pred_check
      %p175 = pneg %p174
    $region30: #{classifier_forward.1} parent=5 // pred_check_branch
      %177 = sbr.rel (%p175) target = $region32
    $region31: #{classifier_forward.1} parent=5 // pred_region
      // Predicated region
      $region33: #{classifier_forward.1} parent=31 // pred_check
        %p178 = pneg %p31
      $region34: #{classifier_forward.1} parent=31 // pred_check_branch
        %180 = sbr.rel (%p178) target = $region36
      $region35: #{classifier_forward.1} parent=31 // pred_region
        %p181 = scmp.lt.s32.totalorder %s11, 1
        %s182 = scalar_select %p181, %s11, 1
        %s183 = smul.addr %s182, 8
        %s184 = scalar_lea.vmem %s0, %s183
      $region36: #{classifier_forward.1} parent=31 // pred_fallthru
        _
    $region32: #{classifier_forward.1} parent=5 // pred_fallthru
      _
    %p185 = scmp.le.s32.totalorder 1, %s11
    %p186 = scmp.lt.s32.totalorder %s11, 3
    %p187 = pnand %p185, %p186
    %p188 = pneg %p187
    // Predicated region
    $region37: #{classifier_forward.1} parent=5 // pred_check
      _
    $region38: #{classifier_forward.1} parent=5 // pred_check_branch
      %190 = sbr.rel (%p187) target = $region40
    $region39: #{classifier_forward.1} parent=5 // pred_region
      %s191 = ssub.s32 %s11, 1
      %p192 = scmp.lt.s32.totalorder %s16, 1
      %s193 = scalar_select %p192, %s16, 1
      %s194 = smul.addr %s193, 8
      %s195 = scalar_lea.vmem %s0, %s194
      %p196 = pneg %p37
      %p197 = pneg %p34
      %p198 = pneg %p58
      %p199 = pneg %p55
      %p200 = pneg %p79
      %p201 = pneg %p76
      %p202 = pneg %p100
      %p203 = pneg %p97
      %p204 = pneg %p121
      %p205 = pneg %p118
      %p206 = pneg %p147
      %p207 = pneg %p144
      %p208 = scmp.lt.s32.totalorder %s16, 1
      %s209 = scalar_select %p208, %s16, 1
      %s210 = smul.addr %s209, 8
      %s211 = scalar_lea.vmem %s5, %s210
      %p212 = scmp.lt.s32.totalorder %s16, 1
      %s213 = scalar_select %p212, %s16, 1
      %s214 = smul.addr %s213, 8
      %s215 = scalar_lea.vmem %s0, %s214
      %p216 = scmp.lt.s32.totalorder %s16, 1
      %s217 = scalar_select %p216, %s16, 1
      %s218 = smul.addr %s217, 8
      %s219 = scalar_lea.vmem %s5, %s218
      %v221 = vld [vmem:[%s215] sm:$0xff]
      %v222 = vpack.c.bf16 %v221, %v221
      %v223 = vld [vmem:[%s1] sm:$0xf]
      %v224 = vld [vmem:[%s1 + $0x4] sm:$0xf]
      %v225 = vld [vmem:[%s1 + $0x8] sm:$0xf]
      %v226 = vld [vmem:[%s1 + $0xc] sm:$0xf]
      %v227 = vld [vmem:[%s2] sm:$0x1]
      %v229 = vlaneseq
      %v230 = vshrl.u32 %v229, 7
      %v231 = vsub.s32 0, %v230
      %v232 = vrot.slane %v227, %v231
      %v238 = vunpack.c.l.b16 %v223
      %v239 = vunpack.c.l.b16 %v224
      %v240 = vunpack.c.l.b16 %v225
      %v241 = vunpack.c.l.b16 %v226
      %v242 = vpack.c.b16 %v239, %v238
      %v243 = vpack.c.b16 %v241, %v240
      %vm246 = vcmask 261120
      %v248 = vsel %vm246, %v222, 0
      %250 = vmatprep.subr.bf16.mxu0 0
      %251 = vmatpush1.bf16.msra.mxu0 %v242
      %252 = vmatprep.subr.bf16.mxu0 0
      %253 = vmatpush1.bf16.msra.mxu0 %v243
      %254 = vmatprep.subr.bf16.mxu0 0
      %255 = vmatpush1.bf16.msra.mxu0 0
      %256 = vmatprep.subr.bf16.mxu0 0
      %257 = vmatpush1.bf16.msra.mxu0 0
      %258 = vmatprep.subr.bf16.mxu0 0
      %259 = vmatpush1.bf16.msra.mxu0 0
      %260 = vmatprep.subr.bf16.mxu0 0
      %261 = vmatpush1.bf16.msra.mxu0 0
      %262 = vmatprep.subr.bf16.mxu0 0
      %263 = vmatpush1.bf16.msra.mxu0 0
      %264 = vmatprep.subr.bf16.mxu0 0
      %265 = vmatpush1.bf16.msra.mxu0 0
      %266 = vmatprep.subr.bf16.mxu0 0
      %267 = vmatpush1.bf16.msra.mxu0 0
      %268 = vmatprep.subr.bf16.mxu0 0
      %269 = vmatpush1.bf16.msra.mxu0 0
      %270 = vmatprep.subr.bf16.mxu0 0
      %271 = vmatpush1.bf16.msra.mxu0 0
      %272 = vmatprep.subr.bf16.mxu0 0
      %273 = vmatpush1.bf16.msra.mxu0 0
      %274 = vmatprep.subr.bf16.mxu0 0
      %275 = vmatpush1.bf16.msra.mxu0 0
      %276 = vmatprep.subr.bf16.mxu0 0
      %277 = vmatpush1.bf16.msra.mxu0 0
      %278 = vmatprep.subr.bf16.mxu0 0
      %279 = vmatpush1.bf16.msra.mxu0 0
      %280 = vmatprep.subr.bf16.mxu0 0
      %281 = vmatpush1.bf16.msra.mxu0 0
      %282 = vmatprep.mubr.bf16.mxu0 0
      %283 = vmatmul.mubr.bf16.gmra.mrb[0].mxu0 %v248
      %v284 = vpop.f32.mrb[0].mxu0
      %v285 = vadd.f32 %v232, %v284
      %v286 = vpop.f32.mrb[0].mxu0
      %v287 = vpop.f32.mrb[0].mxu0
      %v288 = vpop.f32.mrb[0].mxu0
      %289 = vdwg.mxu0
      %v290 = vtanh.pop %v285
      %291 = vadd.xlane.f32.xlu0 %v290
      %v292 = vpop.xlane.xlu0 %291
      %v293 = vmul.f32 %v290, %v290
      %294 = vadd.xlane.f32.xlu0 %v293
      %v295 = vpop.xlane.xlu0 %294
      %v296 = vmul.f32 %v292, 0.015625
      %v297 = vmul.f32 %v295, 0.015625
      %v298 = vmul.f32 %v296, %v296
      %v299 = vsub.f32 %v297, %v298
      %v300 = vmax.f32 %v299, 0.0
      %v301 = vsub.f32 %v290, %v296
      %v302 = vadd.f32 %v300, 1e-05
      %v303 = vrsqrt.pop %v302
      %v304 = vmul.f32 %v301, %v303
      %v305 = vpack.c.bf16 %v304, %v304
      %v306 = vld [vmem:[%s3] sm:$0xf]
      %v307 = vld [vmem:[%s3 + $0x4] sm:$0xf]
      %v308 = vld [vmem:[%s3 + $0x8] sm:$0xf]
      %v309 = vld [vmem:[%s3 + $0xc] sm:$0xf]
      %v310 = vld [vmem:[%s3 + $0x10] sm:$0xf]
      %v311 = vld [vmem:[%s3 + $0x14] sm:$0xf]
      %v312 = vld [vmem:[%s3 + $0x18] sm:$0xf]
      %v313 = vld [vmem:[%s3 + $0x1c] sm:$0xf]
      %v314 = vld [vmem:[%s3 + $0x20] sm:$0xf]
      %v315 = vld [vmem:[%s3 + $0x24] sm:$0xf]
      %v316 = vld [vmem:[%s3 + $0x28] sm:$0xf]
      %v317 = vld [vmem:[%s3 + $0x2c] sm:$0xf]
      %v318 = vld [vmem:[%s3 + $0x30] sm:$0xf]
      %v319 = vld [vmem:[%s3 + $0x34] sm:$0xf]
      %v320 = vld [vmem:[%s3 + $0x38] sm:$0xf]
      %v321 = vld [vmem:[%s3 + $0x3c] sm:$0xf]
      %v322 = vld [vmem:[%s4] sm:$0x1]
      %v324 = vlaneseq
      %v325 = vshrl.u32 %v324, 7
      %v326 = vsub.s32 0, %v325
      %v327 = vrot.slane %v322, %v326
      %v345 = vunpack.c.l.b16 %v306
      %v346 = vunpack.c.l.b16 %v307
      %v347 = vunpack.c.l.b16 %v308
      %v348 = vunpack.c.l.b16 %v309
      %v349 = vunpack.c.l.b16 %v310
      %v350 = vunpack.c.l.b16 %v311
      %v351 = vunpack.c.l.b16 %v312
      %v352 = vunpack.c.l.b16 %v313
      %v353 = vunpack.c.l.b16 %v314
      %v354 = vunpack.c.l.b16 %v315
      %v355 = vunpack.c.l.b16 %v316
      %v356 = vunpack.c.l.b16 %v317
      %v357 = vunpack.c.l.b16 %v318
      %v358 = vunpack.c.l.b16 %v319
      %v359 = vunpack.c.l.b16 %v320
      %v360 = vunpack.c.l.b16 %v321
      %v361 = vpack.c.b16 %v346, %v345
      %v362 = vpack.c.b16 %v348, %v347
      %v363 = vpack.c.b16 %v350, %v349
      %v364 = vpack.c.b16 %v352, %v351
      %v365 = vpack.c.b16 %v354, %v353
      %v366 = vpack.c.b16 %v356, %v355
      %v367 = vpack.c.b16 %v358, %v357
      %v368 = vpack.c.b16 %v360, %v359
      %377 = vmatprep.subr.bf16.mxu0 0
      %378 = vmatpush1.bf16.msra.mxu0 %v361
      %379 = vmatprep.subr.bf16.mxu0 0
      %380 = vmatpush1.bf16.msra.mxu0 %v362
      %381 = vmatprep.subr.bf16.mxu0 0
      %382 = vmatpush1.bf16.msra.mxu0 %v363
      %383 = vmatprep.subr.bf16.mxu0 0
      %384 = vmatpush1.bf16.msra.mxu0 %v364
      %385 = vmatprep.subr.bf16.mxu0 0
      %386 = vmatpush1.bf16.msra.mxu0 %v365
      %387 = vmatprep.subr.bf16.mxu0 0
      %388 = vmatpush1.bf16.msra.mxu0 %v366
      %389 = vmatprep.subr.bf16.mxu0 0
      %390 = vmatpush1.bf16.msra.mxu0 %v367
      %391 = vmatprep.subr.bf16.mxu0 0
      %392 = vmatpush1.bf16.msra.mxu0 %v368
      %393 = vmatprep.subr.bf16.mxu0 0
      %394 = vmatpush1.bf16.msra.mxu0 0
      %395 = vmatprep.subr.bf16.mxu0 0
      %396 = vmatpush1.bf16.msra.mxu0 0
      %397 = vmatprep.subr.bf16.mxu0 0
      %398 = vmatpush1.bf16.msra.mxu0 0
      %399 = vmatprep.subr.bf16.mxu0 0
      %400 = vmatpush1.bf16.msra.mxu0 0
      %401 = vmatprep.subr.bf16.mxu0 0
      %402 = vmatpush1.bf16.msra.mxu0 0
      %403 = vmatprep.subr.bf16.mxu0 0
      %404 = vmatpush1.bf16.msra.mxu0 0
      %405 = vmatprep.subr.bf16.mxu0 0
      %406 = vmatpush1.bf16.msra.mxu0 0
      %407 = vmatprep.subr.bf16.mxu0 0
      %408 = vmatpush1.bf16.msra.mxu0 0
      %409 = vmatprep.mubr.bf16.mxu0 0
      %410 = vmatmul.mubr.bf16.gmra.mrb[0].mxu0 %v305
      %v411 = vpop.f32.mrb[0].mxu0
      %v412 = vadd.f32 %v327, %v411
      %v413 = vpop.f32.mrb[0].mxu0
      %v414 = vpop.f32.mrb[0].mxu0
      %v415 = vpop.f32.mrb[0].mxu0
      %416 = vdwg.mxu0
      %vm417 = vcmask 64512
      %418 = vst.msk [vmem:[%s219] sm:$0xff] %vm417, %v412
      %p419 = scmp.lt.s32.totalorder %s16, 1
      %s420 = scalar_select %p419, %s16, 1
      %s421 = smul.addr %s420, 8
      %s422 = scalar_lea.vmem %s5, %s421
      // Predicated region
      $region41: #{classifier_forward.1} parent=39 // pred_check
        %p423 = pneg %p144
      $region42: #{classifier_forward.1} parent=39 // pred_check_branch
        %425 = sbr.rel (%p423) target = $region44
      $region43: #{classifier_forward.1} parent=39 // pred_region
        _
      $region44: #{classifier_forward.1} parent=39 // pred_fallthru
        _
    $region40: #{classifier_forward.1} parent=5 // pred_fallthru
      _
    %p426 = scmp.le.s32.totalorder 2, %s11
    // Predicated region
    $region45: #{classifier_forward.1} parent=5 // pred_check
      %p427 = pneg %p426
    $region46: #{classifier_forward.1} parent=5 // pred_check_branch
      %429 = sbr.rel (%p427) target = $region48
    $region47: #{classifier_forward.1} parent=5 // pred_region
      %s430 = ssub.s32 %s11, 2
      // Predicated region
      $region49: #{classifier_forward.1} parent=47 // pred_check
        %p431 = pneg %p150
      $region50: #{classifier_forward.1} parent=47 // pred_check_branch
        %433 = sbr.rel (%p431) target = $region52
      $region51: #{classifier_forward.1} parent=47 // pred_region
        %p434 = scmp.lt.s32.totalorder %s17, 1
        %s435 = scalar_select %p434, %s17, 1
        %s436 = smul.addr %s435, 8
        %s437 = scalar_lea.vmem %s5, %s436
      $region52: #{classifier_forward.1} parent=47 // pred_fallthru
        _
    $region48: #{classifier_forward.1} parent=5 // pred_fallthru
      _
  $region6: #{classifier_forward.1} parent=0 // loop_footer
    %s15 = sadd.s32 1, %s11
  $region7: #{classifier_forward.1} parent=0 // loop_footer_branch
    %10 = sbr.rel target = $region3
  $region8: #{classifier_forward.1} parent=0 // loop_exit
    _

</llo_original>
